<compile_context>
chip_gen: v7x
topology: tpu7x:2x2x1
jax: 0.10.0
libtpu: 0.0.40
codegen_flags: <defaults>
</compile_context>

<pallas_src>
import jax
import jax.numpy as jnp
from jax.experimental import pallas as pl
from jax.experimental.pallas import tpu as pltpu


def _leaky_lswish_kernel(p_ref, x_ref, o_ref):
    """Elementwise LeakyLSwish on one (block_rows, lane) tile.

    p_ref: SMEM (3,) f32 -> [d0, d1, s]  with  out = x * (d0 + d1 * tanh(s * x))
           where d0 = sig(alpha) + 0.5*(1-sig(alpha))/1.1,
                 d1 = 0.5*(1-sig(alpha))/1.1, s = softplus(beta)/2
    x_ref: VMEM tile, native dtype
    o_ref: VMEM tile, native dtype
    """
    d0 = p_ref[0]
    d1 = p_ref[1]
    s = p_ref[2]

    # Compute in f32 regardless of input dtype (casts are free slack on this
    # HBM-bound kernel; DMA already happens in the native dtype).
    x = x_ref[...].astype(jnp.float32)
    o_ref[...] = (x * (d0 + d1 * jnp.tanh(s * x))).astype(o_ref.dtype)


def _default_block_budget():
    """Returns (target_block_bytes, vmem_limit_bytes) sized to the chip's VMEM."""
    vmem_cap = 64 << 20  # conservative default (v7x-sized)
    try:
        info = pltpu.get_tpu_info()
        cap = getattr(info, "vmem_capacity_bytes", None)
        if cap:
            vmem_cap = int(cap)
    except Exception:
        pass
    if vmem_cap <= (64 << 20):
        # v7x: 64 MiB physical VMEM -> 4 MiB blocks (<=16 MiB live buffers).
        return 4 << 20, 48 << 20
    # v5e / v6e: 128 MiB physical VMEM -> 8 MiB blocks (<=32 MiB live buffers).
    return 8 << 20, 64 << 20


def leaky_lswish(x, alpha, beta, *, target_block_bytes=None, vmem_limit_bytes=None):
    """Apply LeakyLSwish to a tensor `x` (any shape) with scalar params alpha, beta."""
    orig_shape = x.shape
    orig_dtype = x.dtype

    # --- scalar parameter folding (done once, in f32) ---
    a = jax.nn.sigmoid(jnp.asarray(alpha, jnp.float32).reshape(-1)[0])
    c1 = (1.0 - a) / 1.1
    sp = jax.nn.softplus(jnp.asarray(beta, jnp.float32).reshape(-1)[0])
    # out = c0*x + c1*x*sigmoid(sp*x) = x*(d0 + d1*tanh(s*x))
    params = jnp.stack([a + 0.5 * c1, 0.5 * c1, 0.5 * sp]).astype(jnp.float32)

    # --- generation-aware block / VMEM budget ---
    if target_block_bytes is None or vmem_limit_bytes is None:
        tb, vl = _default_block_budget()
        target_block_bytes = target_block_bytes or tb
        vmem_limit_bytes = vmem_limit_bytes or vl

    flat = x.reshape(-1)
    n = flat.shape[0]
    if n == 0:
        return x

    # --- lane-dense (rows, lane) slab in the NATIVE dtype ---
    lane = 128
    for cand in (1024, 512, 256, 128):
        if n % cand == 0:
            lane = cand
            break
    rem = n % lane          # nonzero only when n is not a multiple of 128
    n_main = n - rem

    if n_main == 0:
        # Fewer than one lane of data; a kernel launch isn't worth it.
        xf = flat.astype(jnp.float32)
        out = (xf * (params[0] + params[1] * jnp.tanh(params[2] * xf)))
        return out.astype(orig_dtype).reshape(orig_shape)

    x_main = flat if rem == 0 else flat[:n_main]
    x2d = x_main.reshape(-1, lane)
    rows = x2d.shape[0]

    # --- block sizing: dtype-aware sublane rounding + full blocks when possible ---
    dtype_bytes = jnp.dtype(orig_dtype).itemsize
    sub = max(8, 32 // dtype_bytes)  # packed sublane multiple: f32->8, bf16->16, int8->32
    block_rows_max = max(sub, (target_block_bytes // (lane * dtype_bytes)) // sub * sub)

    if rows <= block_rows_max:
        # Single full-array block: no per-grid-step overhead at all.
        block_shape = (rows, lane)
        grid = (1,)
    else:
        # Prefer a block_rows that divides rows so every step is a full,
        # unmasked block; fall back to a ragged final block otherwise.
        block_rows = None
        lo = max(sub, (block_rows_max // 4) // sub * sub)
        for cand in range(block_rows_max, lo - 1, -sub):
            if rows % cand == 0:
                block_rows = cand
                break
        if block_rows is None:
            block_rows = block_rows_max  # ragged last block; Pallas masks the writes
        block_shape = (block_rows, lane)
        grid = (pl.cdiv(rows, block_rows),)

    out2d = pl.pallas_call(
        _leaky_lswish_kernel,
        out_shape=jax.ShapeDtypeStruct(x2d.shape, orig_dtype),
        grid=grid,
        in_specs=[
            pl.BlockSpec(memory_space=pltpu.MemorySpace.SMEM),   # folded scalar params
            pl.BlockSpec(block_shape, lambda i: (i, 0)),
        ],
        out_specs=pl.BlockSpec(block_shape, lambda i: (i, 0)),
        compiler_params=pltpu.CompilerParams(
            dimension_semantics=("parallel",),   # shards rows across v7x's 2 TCs
            vmem_limit_bytes=int(vmem_limit_bytes),
        ),
    )(params, x2d)

    out_flat = out2d.reshape(-1)
    if rem:
        # <128-element tail handled outside the kernel (no whole-tensor pad/slice).
        tail = flat[n_main:].astype(jnp.float32)
        tail_out = (tail * (params[0] + params[1] * jnp.tanh(params[2] * tail)))
        out_flat = jnp.concatenate([out_flat, tail_out.astype(orig_dtype)])
    return out_flat.reshape(orig_shape)


def leaky_lswish_ref(x, alpha, beta):
    """Pure-JAX reference matching the PyTorch forward."""
    a = jax.nn.sigmoid(alpha)
    return a * x + (1.0 - a) * (x * jax.nn.sigmoid(x * jax.nn.softplus(beta))) / 1.1


if __name__ == "__main__":
    # Deterministic parameter init, matching nn.Parameter defaults in __init__.
    alpha = jnp.array([-3.0], dtype=jnp.float32)
    beta = jnp.array([0.5], dtype=jnp.float32)

    key = jax.random.PRNGKey(0)
    x = jax.random.normal(key, (2, 4, 16, 16), dtype=jnp.float32)  # NCHW

    out = jax.block_until_ready(leaky_lswish(x, alpha, beta))
    ref = leaky_lswish_ref(x, alpha[0], beta[0])
    assert out.shape == x.shape and out.dtype == x.dtype
    assert jnp.allclose(out, ref, atol=1e-5, rtol=1e-5), "mismatch vs reference"

    # Larger activation: exercises the tiled / multi-step grid path.
    k1, k2 = jax.random.split(key)
    x_big = jax.random.normal(k1, (16, 64, 64, 64), dtype=jnp.float32)
    out_big = jax.block_until_ready(leaky_lswish(x_big, alpha, beta))
    ref_big = leaky_lswish_ref(x_big, alpha[0], beta[0])
    assert jnp.allclose(out_big, ref_big, atol=1e-5, rtol=1e-5), "mismatch (big) vs reference"

    # Misaligned size (n % 128 != 0): aligned prefix via the kernel, tiny tail outside.
    x_odd = jax.random.normal(k2, (5, 201), dtype=jnp.float32)
    out_odd = jax.block_until_ready(leaky_lswish(x_odd, alpha, beta))
    ref_odd = leaky_lswish_ref(x_odd, alpha[0], beta[0])
    assert jnp.allclose(out_odd, ref_odd, atol=1e-5, rtol=1e-5), "mismatch (odd) vs reference"

    # bf16 input: native-dtype DMA, f32 in-register compute, bf16 store.
    x_bf16 = x.astype(jnp.bfloat16)
    out_bf16 = jax.block_until_ready(leaky_lswish(x_bf16, alpha, beta))
    ref_bf16 = leaky_lswish_ref(x_bf16.astype(jnp.float32), alpha[0], beta[0])
    assert out_bf16.dtype == jnp.bfloat16
    assert jnp.allclose(out_bf16.astype(jnp.float32), ref_bf16, atol=2e-2, rtol=2e-2), \
        "mismatch (bf16) vs reference"

    print("KERNEL_OK")
</pallas_src>

<mosaic_0001>
module attributes {stable_mosaic.version = 11 : i64} {
  func.func @_leaky_lswish_kernel(%arg0: i32, %arg1: memref<3xf32, #tpu.memory_space<smem>>, %arg2: memref<2x1024xf32, #tpu.memory_space<vmem>>, %arg3: memref<2x1024xf32, #tpu.memory_space<vmem>>) attributes {dimension_semantics = [#tpu.dimension_semantics<parallel>], iteration_bounds = array<i64: 1>, scalar_prefetch = 0 : i64, scratch_operands = 0 : i64, tpu.core_type = #tpu.core_type<tc>, window_params = [{transform_indices = @transform_0, window_bounds = array<i64: 3>}, {transform_indices = @transform_1, window_bounds = array<i64: 2, 1024>}, {transform_indices = @transform_2, window_bounds = array<i64: 2, 1024>}]} {
    %c0 = arith.constant 0 : index
    %0 = memref.load %arg1[%c0] : memref<3xf32, #tpu.memory_space<smem>>
    %c1 = arith.constant 1 : index
    %1 = memref.load %arg1[%c1] : memref<3xf32, #tpu.memory_space<smem>>
    %c2 = arith.constant 2 : index
    %2 = memref.load %arg1[%c2] : memref<3xf32, #tpu.memory_space<smem>>
    %c0_0 = arith.constant 0 : index
    %c0_1 = arith.constant 0 : index
    %3 = vector.load %arg2[%c0_0, %c0_1] : memref<2x1024xf32, #tpu.memory_space<vmem>>, vector<2x1024xf32>
    %4 = vector.broadcast %2 : f32 to vector<2x1024xf32>
    %5 = arith.mulf %4, %3 : vector<2x1024xf32>
    %6 = math.tanh %5 : vector<2x1024xf32>
    %7 = vector.broadcast %1 : f32 to vector<2x1024xf32>
    %8 = arith.mulf %7, %6 : vector<2x1024xf32>
    %9 = vector.broadcast %0 : f32 to vector<2x1024xf32>
    %10 = arith.addf %9, %8 : vector<2x1024xf32>
    %11 = arith.mulf %3, %10 : vector<2x1024xf32>
    %c0_2 = arith.constant 0 : index
    %c0_3 = arith.constant 0 : index
    %12 = vector.load %arg3[%c0_2, %c0_3] : memref<2x1024xf32, #tpu.memory_space<vmem>>, vector<2x1024xf32>
    tpu.vector_store %arg3[%c0_2, %c0_3], %11 {strides = array<i32>} : memref<2x1024xf32, #tpu.memory_space<vmem>>, vector<2x1024xf32>,
    return
  }
  func.func @transform_0(%arg0: i32) -> i32 {
    %c0_i32 = arith.constant 0 : i32
    %c0_i32_0 = arith.constant 0 : i32
    return %c0_i32 : i32
  }
  func.func @transform_1(%arg0: i32) -> (i32, i32) {
    %c0_i32 = arith.constant 0 : i32
    %c0_i32_0 = arith.constant 0 : i32
    return %arg0, %c0_i32 : i32, i32
  }
  func.func @transform_2(%arg0: i32) -> (i32, i32) {
    %c0_i32 = arith.constant 0 : i32
    %c0_i32_0 = arith.constant 0 : i32
    return %arg0, %c0_i32 : i32, i32
  }
}

</mosaic_0001>

<llo_original>
// kernel: tpu_custom_call.1
$region0: #{tpu_custom_call.1}
  #allocation0 [shape = 'u32[]', space=smem, size = 0x4, offset = 0x4, fixed_abs, tag = 'smem constant byte address 0x4 - core index']
  #allocation1 [shape = 'u32[144,128]{1,0:T(1,128)}', space=vmem, size = 0x12000, scoped, tag = 'internal scratch']
  %s0 = inlined_call_operand.hbm [shape: f32[3], index: 0, kind: input, shape index: {}]
  %s1 = inlined_call_operand.hbm [shape: f32[2,1024], index: 1, kind: input, shape index: {}]
  %s2 = inlined_call_operand.hbm [shape: f32[2,1024], index: 2, kind: output, shape index: {}]
  %s3 = sld [smem:[#allocation0]]
  $region26: #{tpu_custom_call.1} parent=0
    _
  %s5 = ssub.s32 1, %s3
  %s6 = scalar_select 0, %s5, %s3
  $region1: #{tpu_custom_call.1} parent=0
    #allocation2 [shape = 'u8[512]{0}', space=smem, size = 0x200, scoped, tag = 'input window, operand 0, single buffered']
    #allocation3 [shape = 's32[1]{0}', space=sflag, size = 0x4, scoped, tag = 'scoped memory for tpu_custom_call.1']
    #allocation4 [shape = 's32[1]{0}', space=sflag, size = 0x4, scoped, tag = 'scoped memory for tpu_custom_call.1']
    #allocation5 [shape = 's32[1]{0}', space=sflag, size = 0x4, scoped, tag = 'scoped memory for tpu_custom_call.1']
    #allocation6 [shape = 'u8[8192]{0}', space=vmem, size = 0x2000, scoped, tag = 'input window, operand 1, single buffered']
    #allocation7 [shape = 'u8[8192]{0}', space=vmem, size = 0x2000, scoped, tag = 'output window, operand 0, single buffered']
    %7 = vsyncpa [#allocation5], 0
    %8 = vsyncpa [#allocation3], 0
    %9 = vsyncpa [#allocation4], 0
    // Predicated region
    $region2: #{tpu_custom_call.1} parent=1 // pred_check
      _
    $region3: #{tpu_custom_call.1} parent=1 // pred_check_branch
      %11 = sbr.rel (0) target = $region5
    $region4: #{tpu_custom_call.1} parent=1 // pred_region
      %s13 = ssub.s32 16, 16
      %14 = vsyncadd [#allocation5], %s13
      %17 = dma.hbm_to_smem %s0, 16, [#allocation2], [#allocation5]
    $region5: #{tpu_custom_call.1} parent=1 // pred_fallthru
      _
    // Predicated region
    $region6: #{tpu_custom_call.1} parent=1 // pred_check
      _
    $region7: #{tpu_custom_call.1} parent=1 // pred_check_branch
      %19 = sbr.rel (0) target = $region9
    $region8: #{tpu_custom_call.1} parent=1 // pred_region
      %s21 = ssub.s32 256, 256
      %22 = vsyncadd [#allocation3], %s21
      %s24 = sshll.u32 [#allocation6], 4
      %s25 = int_to_ptr.vmem [resolvable:$true] %s24
      %27 = dma.hbm_to_vmem [thread:$0]  %s1, 256, %s25, [#allocation3]
    $region9: #{tpu_custom_call.1} parent=1 // pred_fallthru
      _
    // Predicated region
    $region10: #{tpu_custom_call.1} parent=1 // pred_check
      _
    $region11: #{tpu_custom_call.1} parent=1 // pred_check_branch
      %29 = sbr.rel (0) target = $region13
    $region12: #{tpu_custom_call.1} parent=1 // pred_region
      %30 = dma.done [#allocation5], 16
    $region13: #{tpu_custom_call.1} parent=1 // pred_fallthru
      _
    // Predicated region
    $region14: #{tpu_custom_call.1} parent=1 // pred_check
      _
    $region15: #{tpu_custom_call.1} parent=1 // pred_check_branch
      %32 = sbr.rel (0) target = $region17
    $region16: #{tpu_custom_call.1} parent=1 // pred_region
      %33 = dma.done [#allocation3], 256
    $region17: #{tpu_custom_call.1} parent=1 // pred_fallthru
      _
    %34 = sfence
    %s35 = sld [smem:[#allocation2]]
    %s36 = sld [smem:[#allocation2 + $0x1]]
    %s37 = sld [smem:[#allocation2 + $0x2]]
    %v38 = vld [vmem:[#allocation6] sm:$0xff]
    %v39 = vld [vmem:[#allocation6 + $0x8] sm:$0xff]
    %v40 = vstv %s37
    %v41 = vmul.f32 %v40, %v38
    %v42 = vmul.f32 %v40, %v39
    %v43 = vtanh.pop %v41
    %v44 = vtanh.pop %v42
    %v45 = vstv %s36
    %v46 = vmul.f32 %v45, %v43
    %v47 = vmul.f32 %v45, %v44
    %v48 = vstv %s35
    %v49 = vadd.f32 %v48, %v46
    %v50 = vadd.f32 %v48, %v47
    %v51 = vmul.f32 %v38, %v49
    %v52 = vmul.f32 %v39, %v50
    %53 = vst [vmem:[#allocation7] sm:$0xff] %v51
    %54 = vst [vmem:[#allocation7 + $0x8] sm:$0xff] %v52
    // Predicated region
    $region18: #{tpu_custom_call.1} parent=1 // pred_check
      _
    $region19: #{tpu_custom_call.1} parent=1 // pred_check_branch
      %56 = sbr.rel (0) target = $region21
    $region20: #{tpu_custom_call.1} parent=1 // pred_region
      %s58 = ssub.s32 256, 256
      %59 = vsyncadd [#allocation4], %s58
      %s61 = sshll.u32 [#allocation7], 4
      %s62 = int_to_ptr.vmem [resolvable:$true] %s61
      %64 = dma.vmem_to_hbm [thread:$0]  %s62, 256, %s2, [#allocation4]
    $region21: #{tpu_custom_call.1} parent=1 // pred_fallthru
      _
    // Predicated region
    $region22: #{tpu_custom_call.1} parent=1 // pred_check
      _
    $region23: #{tpu_custom_call.1} parent=1 // pred_check_branch
      %66 = sbr.rel (0) target = $region25
    $region24: #{tpu_custom_call.1} parent=1 // pred_region
      %67 = dma.done [#allocation4], 256
    $region25: #{tpu_custom_call.1} parent=1 // pred_fallthru
      _
    %68 = vsyncpa [#allocation3], 1
    %69 = vsyncpa [#allocation4], 1
    %70 = vsyncpa [#allocation5], 1

</llo_original>
